<compile_context>
chip_gen: v6e
topology: v6e:2x2x1
jax: 0.10.0
libtpu: 0.0.40
codegen_flags: <defaults>
</compile_context>

<pallas_src>
import functools
import math

import numpy as np
import jax
import jax.numpy as jnp
from jax.experimental import pallas as pl
from jax.experimental.pallas import tpu as pltpu

PLOT_DT = 0.000332  # module-level constant in the original file ("1025*dt = 0.34 secs")


# ----------------------------- parameter setup (glue) -----------------------------
def make_basis(rec_len, basis_size, cutoff, use_cosine=False):
    """Replicates PhaseMod.initialize_phases fourier-basis construction.

    Returns the rotor-SHARED basis (basis_size, L) in float64 (torch stores the
    same array repeated n_rotors times; we keep one copy).
    """
    L = 2 ** math.floor(math.log2(rec_len)) + 1
    dt = PLOT_DT
    period_time = L * dt
    taus = np.arange(1, basis_size + 1, dtype=np.float64).reshape(basis_size, 1)
    phi_dot_freqs = (np.arange(L, dtype=np.float64) * dt) * taus
    phi_dot_freqs = phi_dot_freqs * (2.0 * np.pi * cutoff / period_time)
    b = np.cos(phi_dot_freqs) if use_cosine else np.sin(phi_dot_freqs)
    b = b / taus
    return b, L


def init_amplitudes(n_rotors, basis_size, initialization, init_size=1.0):
    """Replicates the deterministic amplitude initializations (shape (R, B, 1))."""
    amps = np.zeros((n_rotors, basis_size, 1), dtype=np.float32)
    if initialization == 'sine':
        amps[:, 0, 0] = init_size
    elif initialization == 'grad_freq_sine':
        for i in range(min(4, n_rotors, basis_size)):
            amps[i, i, 0] = init_size
    elif initialization == 'max_freq_const':
        amps[:, -1, 0] = init_size
    else:
        raise ValueError('unsupported initialization for this synthetic script')
    return amps


def _as_shared_basis(basis):
    """Accept (B, L) or (R, B, L); assert rotor-shared and return (B, L) f64."""
    b = np.asarray(basis, np.float64)
    if b.ndim == 3:
        if not np.array_equal(b, np.broadcast_to(b[:1], b.shape)):
            raise ValueError(
                "fused host fold requires a rotor-shared basis; per-rotor bases "
                "(e.g. 'antiphase_time_domain' init) are not supported by this path")
        b = b[0]
    assert b.ndim == 2, "basis must be (basis_size, L) or (n_rotors, basis_size, L)"
    return b


def make_fused_operator(basis2d_f64, interp_gap, L_pad):
    """Band-wise O(B*L) fold of basis2curve + cubic-Hermite interp into one
    (B, L_pad) f32 operator M such that  out = amps2d @ M  reproduces
    PhaseMod.forward() (torch semantics), with zero-padded trailing columns.

    The knot grid t[::g] is uniform and data-independent, so the decimation,
    the finite-difference slope stencil, searchsorted, the per-query gathers
    and the Hermite blend are all folded analytically per basis row — the
    dense (L, L) Hermite matrix is never materialized.
    """
    B, L = basis2d_f64.shape
    g = int(interp_gap)
    if g <= 1:
        M = basis2d_f64
    else:
        assert (L - 1) % g == 0, "interp_gap must divide recording_length - 1"
        # Knot values of each basis row (== curve[:, ::g] pushed through the fold).
        Y = basis2d_f64[:, ::g]                                    # (B, Nk)
        # Slopes: one-sided endpoints, centered interior averages (torch interp).
        d = (Y[:, 1:] - Y[:, :-1]) / float(g)
        m = np.concatenate([d[:, :1], 0.5 * (d[:, 1:] + d[:, :-1]), d[:, -1:]],
                           axis=1)                                 # (B, Nk)
        xs = np.arange(L, dtype=np.float64)
        knots = xs[::g]
        I = np.searchsorted(knots[1:], xs, side='left')            # torch.searchsorted default
        tt = (xs - knots[I]) / float(g)
        # Hermite basis, identical to PhaseMod.h_poly's A matrix (dx == g everywhere).
        h0 = 1.0 - 3.0 * tt ** 2 + 2.0 * tt ** 3
        h1 = tt - 2.0 * tt ** 2 + tt ** 3
        h2 = 3.0 * tt ** 2 - 2.0 * tt ** 3
        h3 = -(tt ** 2) + tt ** 3
        M = (Y[:, I] * h0 + m[:, I] * (g * h1)
             + Y[:, I + 1] * h2 + m[:, I + 1] * (g * h3))          # (B, L)
    M_pad = np.zeros((B, L_pad), np.float32)
    M_pad[:, :L] = M.astype(np.float32)
    return M_pad


# ----------------------------------- kernel -----------------------------------
def _phasemod_matmul_kernel(amps_ref, m_ref, out_ref):
    # Entire forward: out[:, tile] = amps2d @ M[:, tile]   (single MXU matmul)
    out_ref[...] = jnp.dot(amps_ref[...], m_ref[...],
                           preferred_element_type=jnp.float32)


# ----------------------------------- wrapper -----------------------------------
def _pick_col_tile(L_pad, cap=32768, min_steps=2):
    """Largest 128-multiple tile dividing L_pad under `cap`, preferring >= min_steps
    grid steps so the ("parallel",) column axis can split across v7x's two TCs."""
    best = 128
    for tn in range(128, min(L_pad, cap) + 1, 128):
        if L_pad % tn == 0 and (L_pad // tn >= min_steps or L_pad <= 128):
            best = tn
    return best


def build_phasemod_forward(basis2d, interp_gap, stream_bf16=False):
    """Precompute the fused operator once and return a jitted forward:
        forward(amplitudes: (R, B, 1)) -> (R, L) float32
    """
    basis2d = _as_shared_basis(basis2d)
    B, L = basis2d.shape
    L_pad = ((L + 127) // 128) * 128                     # lane-dense time axis

    # Static host-side fold (data-independent), uploaded to device ONCE.
    M_np = make_fused_operator(basis2d, interp_gap, L_pad)          # (B, L_pad) f32
    compute_dtype = jnp.bfloat16 if stream_bf16 else jnp.float32
    M_dev = jnp.asarray(M_np, compute_dtype)
    elt = 2 if stream_bf16 else 4
    sub = 16 if stream_bf16 else 8                        # sublane tiling for packed dtypes

    tn = _pick_col_tile(L_pad)
    grid = (L_pad // tn,)

    @jax.jit
    def forward(amplitudes):
        R = amplitudes.shape[0]
        assert amplitudes.shape[1] == B
        R_pad = max(sub, ((R + sub - 1) // sub) * sub)    # sublane-aligned rotor count
        amps2d = jnp.pad(amplitudes[..., 0].astype(compute_dtype),
                         ((0, R_pad - R), (0, 0)))        # (R_pad, B), resident operand

        cost = pl.CostEstimate(
            flops=2 * R_pad * B * L_pad,
            transcendentals=0,
            bytes_accessed=(R_pad * B + B * L_pad) * elt + R_pad * L_pad * 4)

        out = pl.pallas_call(
            _phasemod_matmul_kernel,
            out_shape=jax.ShapeDtypeStruct((R_pad, L_pad), jnp.float32),
            grid=grid,
            in_specs=[pl.BlockSpec((R_pad, B), lambda j: (0, 0)),   # amps resident
                      pl.BlockSpec((B, tn), lambda j: (0, j))],     # stream M column tiles
            out_specs=pl.BlockSpec((R_pad, tn), lambda j: (0, j)),  # lane-dense stores
            compiler_params=pltpu.CompilerParams(
                dimension_semantics=("parallel",)),
            cost_estimate=cost,
        )(amps2d, M_dev)
        # Un-pad inside the jit so XLA fuses/elides the slice.
        return out[:R, :L]

    return forward


@functools.lru_cache(maxsize=16)
def _cached_forward(basis_bytes, basis_shape, interp_gap, stream_bf16):
    basis = np.frombuffer(basis_bytes, dtype=np.float64).reshape(basis_shape)
    return build_phasemod_forward(basis, interp_gap, stream_bf16)


def phasemod_forward(amplitudes, basis2d, interp_gap, stream_bf16=False):
    """Convenience wrapper keeping the old signature; the fused operator / jitted
    forward is built once per (basis, interp_gap) and cached."""
    b = np.ascontiguousarray(_as_shared_basis(basis2d))
    fwd = _cached_forward(b.tobytes(), b.shape, int(interp_gap), bool(stream_bf16))
    return fwd(amplitudes)


# --------------------------- pure-numpy reference ---------------------------
def phasemod_forward_ref(amplitudes, basis2d, interp_gap):
    """Direct transcription of PhaseMod.forward (torch semantics, fp64)."""
    amps = np.asarray(amplitudes, np.float64)[:, :, 0]
    bas = np.asarray(basis2d, np.float64)
    x = amps @ bas                                # == sum_b amps[r,b]*basis[b,:]
    if interp_gap <= 1:
        return x
    L = x.shape[1]
    t = np.arange(L, dtype=np.float64)
    t1 = t[::interp_gap]
    out = np.empty_like(x)
    for r in range(x.shape[0]):
        y = x[r, ::interp_gap]
        m = (y[1:] - y[:-1]) / (t1[1:] - t1[:-1])
        m = np.concatenate([m[:1], (m[1:] + m[:-1]) / 2.0, m[-1:]])
        I = np.searchsorted(t1[1:], t, side='left')
        dxv = t1[I + 1] - t1[I]
        tt = (t - t1[I]) / dxv
        h0 = 1.0 - 3.0 * tt ** 2 + 2.0 * tt ** 3
        h1 = tt - 2.0 * tt ** 2 + tt ** 3
        h2 = 3.0 * tt ** 2 - 2.0 * tt ** 3
        h3 = -(tt ** 2) + tt ** 3
        out[r] = h0 * y[I] + h1 * m[I] * dxv + h2 * y[I + 1] + h3 * m[I + 1] * dxv
    return out


if __name__ == "__main__":
    # Module config (the __init__ args that matter for forward()):
    rec_len = 128          # -> recording_length L = 2**7 + 1 = 129
    n_rotors = 4
    basis_size = 8
    cutoff = 8.0
    interp_gap = 4         # must divide L - 1
    init_size = 1.0

    basis2d, L = make_basis(rec_len, basis_size, cutoff, use_cosine=False)
    amps = init_amplitudes(n_rotors, basis_size, 'grad_freq_sine', init_size)
    # Treat amplitudes as the learned parameter: add a deterministic perturbation
    # so every basis component is exercised.
    key = jax.random.PRNGKey(0)
    amps = amps + 0.1 * np.asarray(jax.random.normal(key, amps.shape, dtype=jnp.float32))

    # Build once (uploads the fused operator and jits the forward), then call.
    forward = build_phasemod_forward(basis2d, interp_gap)
    out = jax.block_until_ready(forward(jnp.asarray(amps)))

    ref = phasemod_forward_ref(amps, basis2d, interp_gap)
    assert out.shape == (n_rotors, L) and out.dtype == jnp.float32
    np.testing.assert_allclose(np.asarray(out), ref.astype(np.float32),
                               rtol=1e-3, atol=1e-4)

    # Second call reuses the jitted forward (no re-fold / re-upload / re-trace).
    out2 = jax.block_until_ready(forward(jnp.asarray(amps)))
    np.testing.assert_allclose(np.asarray(out2), np.asarray(out))

    # Also exercise the interp_gap <= 1 (no resampling) path via the cached wrapper.
    out_ng = jax.block_until_ready(phasemod_forward(jnp.asarray(amps), basis2d, 1))
    np.testing.assert_allclose(np.asarray(out_ng),
                               phasemod_forward_ref(amps, basis2d, 1).astype(np.float32),
                               rtol=1e-3, atol=1e-4)

    # Guard: per-rotor (non-shared) basis must be rejected, not silently folded.
    bad_basis = np.repeat(basis2d[None], n_rotors, axis=0).copy()
    bad_basis[1] += 1.0
    try:
        phasemod_forward(jnp.asarray(amps), bad_basis, interp_gap)
        raise AssertionError("expected per-rotor basis to be rejected")
    except ValueError:
        pass

    print("KERNEL_OK")
</pallas_src>

<mosaic_0001>
module attributes {stable_mosaic.version = 11 : i64} {
  func.func @_phasemod_matmul_kernel(%arg0: i32, %arg1: memref<8x8xf32, #tpu.memory_space<vmem>>, %arg2: memref<8x128xf32, #tpu.memory_space<vmem>>, %arg3: memref<8x128xf32, #tpu.memory_space<vmem>>) attributes {dimension_semantics = [#tpu.dimension_semantics<parallel>], iteration_bounds = array<i64: 2>, scalar_prefetch = 0 : i64, scratch_operands = 0 : i64, tpu.core_type = #tpu.core_type<tc>, window_params = [{pipeline_mode = #tpu.pipeline_mode<synchronous>, transform_indices = @transform_0, window_bounds = array<i64: 8, 8>}, {transform_indices = @transform_1, window_bounds = array<i64: 8, 128>}, {transform_indices = @transform_2, window_bounds = array<i64: 8, 128>}]} {
    %c0 = arith.constant 0 : index
    %c0_0 = arith.constant 0 : index
    %0 = vector.load %arg1[%c0, %c0_0] : memref<8x8xf32, #tpu.memory_space<vmem>>, vector<8x8xf32>
    %c0_1 = arith.constant 0 : index
    %c0_2 = arith.constant 0 : index
    %1 = vector.load %arg2[%c0_1, %c0_2] : memref<8x128xf32, #tpu.memory_space<vmem>>, vector<8x128xf32>
    %cst = arith.constant dense<0.000000e+00> : vector<8x128xf32>
    %2 = tpu.matmul %0, %1, %cst {dimension_numbers = #tpu.dot_dimension_numbers<[1], [0], [0], [1], [0, 0, 1, 1], [], []>} : vector<8x8xf32>, vector<8x128xf32>, vector<8x128xf32> -> vector<8x128xf32>
    %c0_3 = arith.constant 0 : index
    %c0_4 = arith.constant 0 : index
    %3 = vector.load %arg3[%c0_3, %c0_4] : memref<8x128xf32, #tpu.memory_space<vmem>>, vector<8x128xf32>
    tpu.vector_store %arg3[%c0_3, %c0_4], %2 {strides = array<i32>} : memref<8x128xf32, #tpu.memory_space<vmem>>, vector<8x128xf32>,
    return
  }
  func.func @transform_0(%arg0: i32) -> (i32, i32) {
    %c0_i32 = arith.constant 0 : i32
    %c0_i32_0 = arith.constant 0 : i32
    %c0_i32_1 = arith.constant 0 : i32
    return %c0_i32, %c0_i32_0 : i32, i32
  }
  func.func @transform_1(%arg0: i32) -> (i32, i32) {
    %c0_i32 = arith.constant 0 : i32
    %c0_i32_0 = arith.constant 0 : i32
    return %c0_i32, %arg0 : i32, i32
  }
  func.func @transform_2(%arg0: i32) -> (i32, i32) {
    %c0_i32 = arith.constant 0 : i32
    %c0_i32_0 = arith.constant 0 : i32
    return %c0_i32, %arg0 : i32, i32
  }
}

</mosaic_0001>

<llo_original>
// kernel: forward.1
$region0: #{forward.1}
  #allocation0 [shape = 'u32[]', space=smem, size = 0x4, offset = 0x4, fixed_abs, tag = 'smem constant byte address 0x4 - core index']
  #allocation1 [shape = 'u32[144,128]{1,0:T(1,128)}', space=vmem, size = 0x12000, scoped, tag = 'internal scratch']
  %s0 = inlined_call_operand.vmem [shape: f32[8,8], index: 0, kind: input, shape index: {}]
  %s1 = inlined_call_operand.vmem [shape: f32[8,256], index: 1, kind: input, shape index: {}]
  %s2 = inlined_call_operand.vmem [shape: f32[8,256], index: 2, kind: output, shape index: {}]
  %s3 = sld [smem:[#allocation0]]
  $region41: #{forward.1} parent=0
    _
  %s5 = ssub.s32 1, %s3
  %s6 = scalar_select 0, %s5, %s3
  loop: start=0, step=1, limit=4
  $region2: #{forward.1} parent=0 // loop_pre_header
    _
  $region3: #{forward.1} parent=0 // loop_header
    %s8 = sphi 0, %s12
    %p9 = scmp.ge.s32.totalorder %s8, 4
    %s16 = sphi 0, %s16
    %s18 = sphi 0, %s16
    %s19 = sphi 0, %s18
    %s33 = sphi 0, %s19
    %s39 = sphi 0, %s41
    %s42 = sphi 0, %s39
    %s43 = sphi 0, %s42
    %s59 = sphi 0, %s43
    %s65 = sphi 0, %s67
    %s68 = sphi 0, %s65
    %s69 = sphi 0, %s68
    %s85 = sphi 0, %s69
  $region4: #{forward.1} parent=0 // loop_header_branch
    %11 = sbr.rel (%p9) target = $region8
  $region5: #{forward.1} parent=0 // loop_body
    %s13 = ssub.s32 %s8, 1
    %s14 = ssub.s32 %s8, 2
    %s15 = sadd.s32 %s8, 1
    %s17 = sadd.s32 %s16, 1
    %p20 = scmp.eq.s32.totalorder %s8, 1
    %p21 = scmp.ne.s32.totalorder %s16, %s18
    %p22 = scmp.eq.s32.totalorder %s8, 0
    %p23 = por %p21, %p22
    %p24 = scmp.ne.s32.totalorder %s16, %s18
    %p25 = scmp.eq.s32.totalorder %s13, 1
    %p26 = por %p24, %p25
    %p27 = scmp.ne.s32.totalorder %s18, %s19
    %p28 = scmp.eq.s32.totalorder %s13, 0
    %p29 = por %p27, %p28
    %p30 = scmp.ne.s32.totalorder %s18, %s19
    %p31 = scmp.eq.s32.totalorder %s14, 1
    %p32 = por %p30, %p31
    %p34 = scmp.ne.s32.totalorder %s19, %s33
    %p35 = scmp.eq.s32.totalorder %s14, 0
    %p36 = por %p34, %p35
    %s37 = ssub.s32 %s8, %s15
    %p38 = scmp.eq.s32.totalorder %s37, 0
    %s40 = sadd.s32 %s39, 1
    %s41 = scalar_select %p38, %s39, %s40
    %p44 = pneg %p38
    %p45 = scmp.eq.s32.totalorder %s8, 1
    %p46 = por %p44, %p45
    %p47 = scmp.ne.s32.totalorder %s39, %s42
    %p48 = scmp.eq.s32.totalorder %s8, 0
    %p49 = por %p47, %p48
    %p50 = scmp.ne.s32.totalorder %s39, %s42
    %p51 = scmp.eq.s32.totalorder %s13, 1
    %p52 = por %p50, %p51
    %p53 = scmp.ne.s32.totalorder %s42, %s43
    %p54 = scmp.eq.s32.totalorder %s13, 0
    %p55 = por %p53, %p54
    %p56 = scmp.ne.s32.totalorder %s42, %s43
    %p57 = scmp.eq.s32.totalorder %s14, 1
    %p58 = por %p56, %p57
    %p60 = scmp.ne.s32.totalorder %s43, %s59
    %p61 = scmp.eq.s32.totalorder %s14, 0
    %p62 = por %p60, %p61
    %s63 = ssub.s32 %s8, %s15
    %p64 = scmp.eq.s32.totalorder %s63, 0
    %s66 = sadd.s32 %s65, 1
    %s67 = scalar_select %p64, %s65, %s66
    %p70 = pneg %p64
    %p71 = scmp.eq.s32.totalorder %s8, 1
    %p72 = por %p70, %p71
    %p73 = scmp.ne.s32.totalorder %s65, %s68
    %p74 = scmp.eq.s32.totalorder %s8, 0
    %p75 = por %p73, %p74
    %p76 = scmp.ne.s32.totalorder %s65, %s68
    %p77 = scmp.eq.s32.totalorder %s13, 1
    %p78 = por %p76, %p77
    %p79 = scmp.ne.s32.totalorder %s68, %s69
    %p80 = scmp.eq.s32.totalorder %s13, 0
    %p81 = por %p79, %p80
    %p82 = scmp.ne.s32.totalorder %s68, %s69
    %p83 = scmp.eq.s32.totalorder %s14, 1
    %p84 = por %p82, %p83
    %p86 = scmp.ne.s32.totalorder %s69, %s85
    %p87 = scmp.eq.s32.totalorder %s14, 0
    %p88 = por %p86, %p87
    %p89 = scmp.le.s32.totalorder 1, %s8
    %p90 = scmp.lt.s32.totalorder %s8, 3
    %p91 = pnand %p89, %p90
    %p92 = pneg %p91
    // Predicated region
    $region9: #{forward.1} parent=5 // pred_check
      _
    $region10: #{forward.1} parent=5 // pred_check_branch
      %94 = sbr.rel (%p91) target = $region12
    $region11: #{forward.1} parent=5 // pred_region
      %s95 = ssub.s32 %s8, 1
      // Predicated region
      $region13: #{forward.1} parent=11 // pred_check
        %p96 = pneg %p29
      $region14: #{forward.1} parent=11 // pred_check_branch
        %98 = sbr.rel (%p96) target = $region16
      $region15: #{forward.1} parent=11 // pred_region
        _
      $region16: #{forward.1} parent=11 // pred_fallthru
        _
    $region12: #{forward.1} parent=5 // pred_fallthru
      _
    %p99 = scmp.lt.s32.totalorder %s8, 2
    // Predicated region
    $region17: #{forward.1} parent=5 // pred_check
      %p100 = pneg %p99
    $region18: #{forward.1} parent=5 // pred_check_branch
      %102 = sbr.rel (%p100) target = $region20
    $region19: #{forward.1} parent=5 // pred_region
      // Predicated region
      $region21: #{forward.1} parent=19 // pred_check
        %p103 = pneg %p49
      $region22: #{forward.1} parent=19 // pred_check_branch
        %105 = sbr.rel (%p103) target = $region24
      $region23: #{forward.1} parent=19 // pred_region
        %p106 = scmp.lt.s32.totalorder %s8, 1
        %s107 = scalar_select %p106, %s8, 1
        %s108 = smul.addr %s107, 8
        %s109 = scalar_lea.vmem %s1, %s108
      $region24: #{forward.1} parent=19 // pred_fallthru
        _
    $region20: #{forward.1} parent=5 // pred_fallthru
      _
    %p110 = scmp.le.s32.totalorder 1, %s8
    %p111 = scmp.lt.s32.totalorder %s8, 3
    %p112 = pnand %p110, %p111
    %p113 = pneg %p112
    // Predicated region
    $region25: #{forward.1} parent=5 // pred_check
      _
    $region26: #{forward.1} parent=5 // pred_check_branch
      %115 = sbr.rel (%p112) target = $region28
    $region27: #{forward.1} parent=5 // pred_region
      %s116 = ssub.s32 %s8, 1
      %p117 = pneg %p29
      %p118 = pneg %p26
      %p119 = scmp.lt.s32.totalorder %s13, 1
      %s120 = scalar_select %p119, %s13, 1
      %s121 = smul.addr %s120, 8
      %s122 = scalar_lea.vmem %s1, %s121
      %p123 = pneg %p55
      %p124 = pneg %p52
      %p125 = pneg %p81
      %p126 = pneg %p78
      %p127 = scmp.lt.s32.totalorder %s13, 1
      %s128 = scalar_select %p127, %s13, 1
      %s129 = smul.addr %s128, 8
      %s130 = scalar_lea.vmem %s2, %s129
      %p131 = scmp.lt.s32.totalorder %s13, 1
      %s132 = scalar_select %p131, %s13, 1
      %s133 = smul.addr %s132, 8
      %s134 = scalar_lea.vmem %s1, %s133
      %p135 = scmp.lt.s32.totalorder %s13, 1
      %s136 = scalar_select %p135, %s13, 1
      %s137 = smul.addr %s136, 8
      %s138 = scalar_lea.vmem %s2, %s137
      %v139 = vld [vmem:[%s0] sm:$0xff]
      %v140 = vld [vmem:[%s134] sm:$0xff]
      %vm141 = vcmask 64512
      %v143 = vsel %vm141, %v139, 0
      %145 = vmatprep.subr.mxu0 0.0
      %146 = vmatpush1.msra.mxu0 0.0
      %147 = vmatprep.subr.mxu0 0.0
      %148 = vmatpush1.msra.mxu0 0.0
      %149 = vmatprep.subr.mxu0 0.0
      %150 = vmatpush1.msra.mxu0 0.0
      %151 = vmatprep.subr.mxu0 0.0
      %152 = vmatpush1.msra.mxu0 0.0
      %153 = vmatprep.subr.mxu0 0.0
      %154 = vmatpush1.msra.mxu0 0.0
      %155 = vmatprep.subr.mxu0 0.0
      %156 = vmatpush1.msra.mxu0 0.0
      %157 = vmatprep.subr.mxu0 0.0
      %158 = vmatpush1.msra.mxu0 0.0
      %159 = vmatprep.subr.mxu0 0.0
      %160 = vmatpush1.msra.mxu0 0.0
      %161 = vmatprep.subr.mxu0 0.0
      %162 = vmatpush1.msra.mxu0 0.0
      %163 = vmatprep.subr.mxu0 0.0
      %164 = vmatpush1.msra.mxu0 0.0
      %165 = vmatprep.subr.mxu0 0.0
      %166 = vmatpush1.msra.mxu0 0.0
      %167 = vmatprep.subr.mxu0 0.0
      %168 = vmatpush1.msra.mxu0 0.0
      %169 = vmatprep.subr.mxu0 0.0
      %170 = vmatpush1.msra.mxu0 0.0
      %171 = vmatprep.subr.mxu0 0.0
      %172 = vmatpush1.msra.mxu0 0.0
      %173 = vmatprep.subr.mxu0 0.0
      %174 = vmatpush1.msra.mxu0 0.0
      %175 = vmatprep.subr.mxu0 0.0
      %176 = vmatpush1.msra.mxu0 %v140
      %177 = vmatprep.subr.mxu0 0.0
      %178 = vmatpush2.msra.mxu0 0.0
      %179 = vmatprep.subr.mxu0 0.0
      %180 = vmatpush2.msra.mxu0 0.0
      %181 = vmatprep.subr.mxu0 0.0
      %182 = vmatpush2.msra.mxu0 0.0
      %183 = vmatprep.subr.mxu0 0.0
      %184 = vmatpush2.msra.mxu0 0.0
      %185 = vmatprep.subr.mxu0 0.0
      %186 = vmatpush2.msra.mxu0 0.0
      %187 = vmatprep.subr.mxu0 0.0
      %188 = vmatpush2.msra.mxu0 0.0
      %189 = vmatprep.subr.mxu0 0.0
      %190 = vmatpush2.msra.mxu0 0.0
      %191 = vmatprep.subr.mxu0 0.0
      %192 = vmatpush2.msra.mxu0 0.0
      %193 = vmatprep.subr.mxu0 0.0
      %194 = vmatpush2.msra.mxu0 0.0
      %195 = vmatprep.subr.mxu0 0.0
      %196 = vmatpush2.msra.mxu0 0.0
      %197 = vmatprep.subr.mxu0 0.0
      %198 = vmatpush2.msra.mxu0 0.0
      %199 = vmatprep.subr.mxu0 0.0
      %200 = vmatpush2.msra.mxu0 0.0
      %201 = vmatprep.subr.mxu0 0.0
      %202 = vmatpush2.msra.mxu0 0.0
      %203 = vmatprep.subr.mxu0 0.0
      %204 = vmatpush2.msra.mxu0 0.0
      %205 = vmatprep.subr.mxu0 0.0
      %206 = vmatpush2.msra.mxu0 0.0
      %207 = vmatprep.subr.mxu0 0.0
      %208 = vmatpush2.msra.mxu0 0.0
      %209 = vmatprep.mubr.f32.mxu0 0.0
      %210 = vmatmul.mubr.f32.gmra.mxu0 %v143
      %v211 = vpop.f32.mrf.mxu0
      %v212 = vadd.f32 0.0, %v211
      %v213 = vpop.f32.mrf.mxu0
      %214 = vdwg.mxu0
      %215 = vst [vmem:[%s138] sm:$0xff] %v212
      %p216 = scmp.lt.s32.totalorder %s13, 1
      %s217 = scalar_select %p216, %s13, 1
      %s218 = smul.addr %s217, 8
      %s219 = scalar_lea.vmem %s2, %s218
      // Predicated region
      $region29: #{forward.1} parent=27 // pred_check
        %p220 = pneg %p78
      $region30: #{forward.1} parent=27 // pred_check_branch
        %222 = sbr.rel (%p220) target = $region32
      $region31: #{forward.1} parent=27 // pred_region
        _
      $region32: #{forward.1} parent=27 // pred_fallthru
        _
    $region28: #{forward.1} parent=5 // pred_fallthru
      _
    %p223 = scmp.le.s32.totalorder 2, %s8
    // Predicated region
    $region33: #{forward.1} parent=5 // pred_check
      %p224 = pneg %p223
    $region34: #{forward.1} parent=5 // pred_check_branch
      %226 = sbr.rel (%p224) target = $region36
    $region35: #{forward.1} parent=5 // pred_region
      %s227 = ssub.s32 %s8, 2
      // Predicated region
      $region37: #{forward.1} parent=35 // pred_check
        %p228 = pneg %p84
      $region38: #{forward.1} parent=35 // pred_check_branch
        %230 = sbr.rel (%p228) target = $region40
      $region39: #{forward.1} parent=35 // pred_region
        %p231 = scmp.lt.s32.totalorder %s14, 1
        %s232 = scalar_select %p231, %s14, 1
        %s233 = smul.addr %s232, 8
        %s234 = scalar_lea.vmem %s2, %s233
      $region40: #{forward.1} parent=35 // pred_fallthru
        _
    $region36: #{forward.1} parent=5 // pred_fallthru
      _
  $region6: #{forward.1} parent=0 // loop_footer
    %s12 = sadd.s32 1, %s8
  $region7: #{forward.1} parent=0 // loop_footer_branch
    %7 = sbr.rel target = $region3
  $region8: #{forward.1} parent=0 // loop_exit
    _

</llo_original>
